<compile_context>
chip_gen: v5e
topology: v5e:2x2
jax: 0.10.0
libtpu: 0.0.40
codegen_flags: <defaults>
</compile_context>

<pallas_src>
import functools

import jax
import jax.numpy as jnp
from jax import lax
from jax.experimental import pallas as pl
from jax.experimental.pallas import tpu as pltpu


BN_EPS = 1e-5
SQUASH_EPS = 1e-7


def _round_up(n, m):
    return ((n + m - 1) // m) * m


def _vmem_limit(active_bytes):
    # Double-buffer headroom on tiles plus slack for compiler temporaries,
    # capped safely below v7x's 64 MiB physical VMEM per TensorCore.
    return int(min(max(2 * active_bytes + (8 << 20), 16 << 20), 48 << 20))


def _stats_kernel(x_ref, w_ref, sum_ref, ssq_ref):
    # x_ref: (TB, F) bf16 batch tile; w_ref: (F, CDp) bf16 fused weight.
    # sum_ref / ssq_ref: (1, CDp) f32 resident accumulators (constant block).
    @pl.when(pl.program_id(0) == 0)
    def _():
        sum_ref[...] = jnp.zeros_like(sum_ref)
        ssq_ref[...] = jnp.zeros_like(ssq_ref)

    # bf16 operands, f32 accumulation on the MXU.  Bias dropped (cancels
    # against the BatchNorm batch-mean subtraction).
    u = jnp.dot(x_ref[...], w_ref[...], preferred_element_type=jnp.float32)
    sum_ref[...] += jnp.sum(u, axis=0, keepdims=True)
    ssq_ref[...] += jnp.sum(u * u, axis=0, keepdims=True)


def _apply_kernel(x_ref, w_ref, gamma_ref, beta_ref, mask_ref, sum_ref,
                  ssq_ref, o_ref, *, inv_batch):
    # Recompute u for this batch tile (F is tiny, cheaper than staging u).
    u = jnp.dot(x_ref[...], w_ref[...], preferred_element_type=jnp.float32)

    # BatchNorm1d (training mode, biased variance) as one wide FMA:
    #   y = u * s + t,  s = gamma * rsqrt(var + eps),  t = beta - mean * s
    mean = sum_ref[...] * inv_batch                       # (1, CDp)
    var = ssq_ref[...] * inv_batch - mean * mean          # (1, CDp)
    s = gamma_ref[...] * lax.rsqrt(var + BN_EPS)          # gamma=0 on pad cols
    t = beta_ref[...] - mean * s
    y = u * s + t                                         # (TB, CDp)

    # Squash: per-capsule sum of y^2 via ONE block-diagonal matmul (already
    # broadcast back to full width), then a wide EUP/VPU epilogue.
    sq = jnp.dot(y * y, mask_ref[...], preferred_element_type=jnp.float32)
    factor = (sq * lax.rsqrt(sq + SQUASH_EPS)
              * pl.reciprocal(1.0 + sq, approx=True))     # (TB, CDp)
    o_ref[...] = (y * factor).astype(o_ref.dtype)


def capsule_layer(x, W, b, gamma, beta, *, tile_b=None):
    """x: (B, F); W: (C, F, D); b/gamma/beta: (C, D) -> (B, C, D) float32."""
    B, F = x.shape
    C, F2, D = W.shape
    assert F2 == F
    CD = C * D
    CDp = _round_up(CD, 128)          # lane-dense padded column dimension

    # Fuse the capsule axis into the Linear weight: (C, F, D) -> (F, C*D),
    # capsule-major / D-minor columns; zero-pad columns to CDp; bf16 MXU feed.
    w_fused = jnp.transpose(W, (1, 0, 2)).reshape(F, CD)
    w_fused = jnp.pad(w_fused, ((0, 0), (0, CDp - CD))).astype(jnp.bfloat16)
    gamma_flat = jnp.pad(gamma.reshape(1, CD),
                         ((0, 0), (0, CDp - CD))).astype(jnp.float32)
    beta_flat = jnp.pad(beta.reshape(1, CD),
                        ((0, 0), (0, CDp - CD))).astype(jnp.float32)
    del b  # Linear bias cancels against training-mode BN mean subtraction.

    # Block-diagonal capsule mask, hoisted out of the kernel.  Padded columns
    # (index >= C*D) are excluded so they never leak into the squared norms.
    col = jnp.arange(CDp)
    cap = col // D
    valid = col < CD
    mask = ((cap[:, None] == cap[None, :])
            & valid[:, None] & valid[None, :]).astype(jnp.float32)

    # Batch tile: multiple of 16 (bf16 sublane packing), capped by a VMEM
    # budget (x tile + output tile + wide f32 intermediates).
    if tile_b is None:
        per_row = 2 * F * 2 + 8 * CDp * 4
        tile_b = max(16, min(((24 << 20) // per_row) // 16 * 16, 1024))
    TB = _round_up(min(tile_b, _round_up(B, 16)), 16)
    B_pad = _round_up(B, TB)
    n_bt = B_pad // TB

    # Padded batch rows are zero => u = 0 there (no bias), so they contribute
    # nothing to the stats sums; we still divide by the REAL batch size.
    x_pad = jnp.pad(x, ((0, B_pad - B), (0, 0))).astype(jnp.bfloat16)

    bytes_x_tile = TB * F * 2
    bytes_w = F * CDp * 2
    bytes_vec = CDp * 4
    bytes_wide = TB * CDp * 4
    vmem1 = _vmem_limit(2 * bytes_x_tile + bytes_w + 2 * bytes_vec
                        + 3 * bytes_wide)
    vmem2 = _vmem_limit(2 * bytes_x_tile + bytes_w + 4 * bytes_vec
                        + CDp * CDp * 4 + 8 * bytes_wide)

    # ---- Pass 1: accumulate per-column sum(u) and sum(u*u) over the batch.
    sum_u, ssq_u = pl.pallas_call(
        _stats_kernel,
        out_shape=(jax.ShapeDtypeStruct((1, CDp), jnp.float32),
                   jax.ShapeDtypeStruct((1, CDp), jnp.float32)),
        grid_spec=pltpu.PrefetchScalarGridSpec(
            num_scalar_prefetch=0,
            grid=(n_bt,),
            in_specs=[pl.BlockSpec((TB, F), lambda i: (i, 0)),
                      pl.BlockSpec((F, CDp), lambda i: (0, 0))],
            out_specs=[pl.BlockSpec((1, CDp), lambda i: (0, 0)),
                       pl.BlockSpec((1, CDp), lambda i: (0, 0))]),
        compiler_params=pltpu.CompilerParams(
            dimension_semantics=("arbitrary",),
            vmem_limit_bytes=vmem1),
    )(x_pad, w_fused)

    # ---- Pass 2: recompute u per tile, fused BN + squash, lane-dense store.
    out_flat = pl.pallas_call(
        functools.partial(_apply_kernel, inv_batch=1.0 / B),
        out_shape=jax.ShapeDtypeStruct((B_pad, CDp), jnp.float32),
        grid_spec=pltpu.PrefetchScalarGridSpec(
            num_scalar_prefetch=0,
            grid=(n_bt,),
            in_specs=[pl.BlockSpec((TB, F), lambda i: (i, 0)),
                      pl.BlockSpec((F, CDp), lambda i: (0, 0)),
                      pl.BlockSpec((1, CDp), lambda i: (0, 0)),
                      pl.BlockSpec((1, CDp), lambda i: (0, 0)),
                      pl.BlockSpec((CDp, CDp), lambda i: (0, 0)),
                      pl.BlockSpec((1, CDp), lambda i: (0, 0)),
                      pl.BlockSpec((1, CDp), lambda i: (0, 0))],
            out_specs=pl.BlockSpec((TB, CDp), lambda i: (i, 0))),
        compiler_params=pltpu.CompilerParams(
            dimension_semantics=("parallel",),
            vmem_limit_bytes=vmem2),
    )(x_pad, w_fused, gamma_flat, beta_flat, mask, sum_u, ssq_u)

    # Drop batch/column padding, then a contiguous reshape to (B, C, D)
    # (matches torch.stack(u, dim=1) layout).
    return out_flat[:B, :CD].reshape(B, C, D)


def capsule_layer_ref(x, W, b, gamma, beta):
    """Pure-JAX f32 reference (includes the Linear bias)."""
    u = jnp.einsum("bf,cfd->bcd", x, W) + b[None, :, :]
    mean = jnp.mean(u, axis=0, keepdims=True)
    var = jnp.mean((u - mean) ** 2, axis=0, keepdims=True)
    y = (u - mean) / jnp.sqrt(var + BN_EPS) * gamma[None] + beta[None]
    sq = jnp.sum(y * y, axis=-1, keepdims=True)
    return sq / (1.0 + sq) * y / jnp.sqrt(sq + SQUASH_EPS)


if __name__ == "__main__":
    # Small shapes consistent with the module's forward.
    batch = 8
    num_features = 32
    out_features = 16
    num_capsules = 4
    routing_iters = 3  # present in the module signature; unused by forward()

    key = jax.random.PRNGKey(0)
    kx, kw, kb, kg, kbe = jax.random.split(key, 5)

    x = jax.random.normal(kx, (batch, num_features), dtype=jnp.float32)
    W = 0.1 * jax.random.normal(
        kw, (num_capsules, num_features, out_features), jnp.float32)
    b = 0.05 * jax.random.normal(kb, (num_capsules, out_features), jnp.float32)
    gamma = 1.0 + 0.1 * jax.random.normal(
        kg, (num_capsules, out_features), jnp.float32)
    beta = 0.1 * jax.random.normal(kbe, (num_capsules, out_features), jnp.float32)

    out = jax.block_until_ready(capsule_layer(x, W, b, gamma, beta))
    ref = jax.block_until_ready(capsule_layer_ref(x, W, b, gamma, beta))
    assert out.shape == (batch, num_capsules, out_features)
    # bf16 MXU feed + approx reciprocal => allow a few 1e-3 of slack vs the
    # f32 reference (observed error is well below this).
    assert jnp.allclose(out, ref, atol=2e-2, rtol=2e-2), "mismatch vs reference"

    # Multi-tile path: force tile_b=16 so the two-pass BN-statistics
    # accumulation crosses several batch tiles (and batch padding is used).
    batch2 = 40
    x2 = jax.random.normal(jax.random.PRNGKey(1), (batch2, num_features),
                           jnp.float32)
    out2 = jax.block_until_ready(
        capsule_layer(x2, W, b, gamma, beta, tile_b=16))
    ref2 = capsule_layer_ref(x2, W, b, gamma, beta)
    assert out2.shape == (batch2, num_capsules, out_features)
    assert jnp.allclose(out2, ref2, atol=2e-2, rtol=2e-2), "multi-tile mismatch"

    print("KERNEL_OK")
</pallas_src>

<mosaic_0001>
module attributes {stable_mosaic.version = 11 : i64} {
  func.func @_stats_kernel(%arg0: i32, %arg1: memref<16x32xbf16, #tpu.memory_space<vmem>>, %arg2: memref<32x128xbf16, #tpu.memory_space<vmem>>, %arg3: memref<1x128xf32, #tpu.memory_space<vmem>>, %arg4: memref<1x128xf32, #tpu.memory_space<vmem>>) attributes {dimension_semantics = [#tpu.dimension_semantics<arbitrary>], iteration_bounds = array<i64: 1>, scalar_prefetch = 0 : i64, scratch_operands = 0 : i64, tpu.core_type = #tpu.core_type<tc>, window_params = [{transform_indices = @transform_0, window_bounds = array<i64: 16, 32>}, {pipeline_mode = #tpu.pipeline_mode<synchronous>, transform_indices = @transform_1, window_bounds = array<i64: 32, 128>}, {pipeline_mode = #tpu.pipeline_mode<synchronous>, transform_indices = @transform_2, window_bounds = array<i64: 1, 128>}, {pipeline_mode = #tpu.pipeline_mode<synchronous>, transform_indices = @transform_3, window_bounds = array<i64: 1, 128>}]} {
    %c0_i32 = arith.constant 0 : i32
    %0 = arith.cmpi eq, %arg0, %c0_i32 : i32
    %1 = arith.extui %0 : i1 to i32
    %c0_i32_0 = arith.constant 0 : i32
    %2 = arith.cmpi ne, %1, %c0_i32_0 : i32
    scf.if %2 {
      %cst_14 = arith.constant 0.000000e+00 : f32
      %17 = vector.broadcast %cst_14 : f32 to vector<1x128xf32>
      %c0_15 = arith.constant 0 : index
      %c0_16 = arith.constant 0 : index
      %18 = vector.load %arg3[%c0_15, %c0_16] : memref<1x128xf32, #tpu.memory_space<vmem>>, vector<1x128xf32>
      tpu.vector_store %arg3[%c0_15, %c0_16], %17 {strides = array<i32>} : memref<1x128xf32, #tpu.memory_space<vmem>>, vector<1x128xf32>,
      %cst_17 = arith.constant 0.000000e+00 : f32
      %19 = vector.broadcast %cst_17 : f32 to vector<1x128xf32>
      %c0_18 = arith.constant 0 : index
      %c0_19 = arith.constant 0 : index
      %20 = vector.load %arg4[%c0_18, %c0_19] : memref<1x128xf32, #tpu.memory_space<vmem>>, vector<1x128xf32>
      tpu.vector_store %arg4[%c0_18, %c0_19], %19 {strides = array<i32>} : memref<1x128xf32, #tpu.memory_space<vmem>>, vector<1x128xf32>,
    } else {
    }
    %c0 = arith.constant 0 : index
    %c0_1 = arith.constant 0 : index
    %3 = vector.load %arg1[%c0, %c0_1] : memref<16x32xbf16, #tpu.memory_space<vmem>>, vector<16x32xbf16>
    %c0_2 = arith.constant 0 : index
    %c0_3 = arith.constant 0 : index
    %4 = vector.load %arg2[%c0_2, %c0_3] : memref<32x128xbf16, #tpu.memory_space<vmem>>, vector<32x128xbf16>
    %cst = arith.constant dense<0.000000e+00> : vector<16x128xf32>
    %5 = tpu.matmul %3, %4, %cst {dimension_numbers = #tpu.dot_dimension_numbers<[1], [0], [0], [1], [0, 0, 1, 1], [], []>} : vector<16x32xbf16>, vector<32x128xbf16>, vector<16x128xf32> -> vector<16x128xf32>
    %c0_4 = arith.constant 0 : index
    %c0_5 = arith.constant 0 : index
    %6 = vector.load %arg3[%c0_4, %c0_5] : memref<1x128xf32, #tpu.memory_space<vmem>>, vector<1x128xf32>
    %cst_6 = arith.constant dense<0.000000e+00> : vector<128xf32>
    %7 = vector.multi_reduction <add>, %5, %cst_6 [0] : vector<16x128xf32> to vector<128xf32>
    %8 = vector.shape_cast %7 : vector<128xf32> to vector<1x128xf32>
    %9 = arith.addf %6, %8 : vector<1x128xf32>
    %c0_7 = arith.constant 0 : index
    %c0_8 = arith.constant 0 : index
    %10 = vector.load %arg3[%c0_7, %c0_8] : memref<1x128xf32, #tpu.memory_space<vmem>>, vector<1x128xf32>
    tpu.vector_store %arg3[%c0_7, %c0_8], %9 {strides = array<i32>} : memref<1x128xf32, #tpu.memory_space<vmem>>, vector<1x128xf32>,
    %c0_9 = arith.constant 0 : index
    %c0_10 = arith.constant 0 : index
    %11 = vector.load %arg4[%c0_9, %c0_10] : memref<1x128xf32, #tpu.memory_space<vmem>>, vector<1x128xf32>
    %12 = arith.mulf %5, %5 : vector<16x128xf32>
    %cst_11 = arith.constant dense<0.000000e+00> : vector<128xf32>
    %13 = vector.multi_reduction <add>, %12, %cst_11 [0] : vector<16x128xf32> to vector<128xf32>
    %14 = vector.shape_cast %13 : vector<128xf32> to vector<1x128xf32>
    %15 = arith.addf %11, %14 : vector<1x128xf32>
    %c0_12 = arith.constant 0 : index
    %c0_13 = arith.constant 0 : index
    %16 = vector.load %arg4[%c0_12, %c0_13] : memref<1x128xf32, #tpu.memory_space<vmem>>, vector<1x128xf32>
    tpu.vector_store %arg4[%c0_12, %c0_13], %15 {strides = array<i32>} : memref<1x128xf32, #tpu.memory_space<vmem>>, vector<1x128xf32>,
    return
  }
  func.func @transform_0(%arg0: i32) -> (i32, i32) {
    %c0_i32 = arith.constant 0 : i32
    %c0_i32_0 = arith.constant 0 : i32
    return %arg0, %c0_i32 : i32, i32
  }
  func.func @transform_1(%arg0: i32) -> (i32, i32) {
    %c0_i32 = arith.constant 0 : i32
    %c0_i32_0 = arith.constant 0 : i32
    %c0_i32_1 = arith.constant 0 : i32
    return %c0_i32, %c0_i32_0 : i32, i32
  }
  func.func @transform_2(%arg0: i32) -> (i32, i32) {
    %c0_i32 = arith.constant 0 : i32
    %c0_i32_0 = arith.constant 0 : i32
    %c0_i32_1 = arith.constant 0 : i32
    return %c0_i32, %c0_i32_0 : i32, i32
  }
  func.func @transform_3(%arg0: i32) -> (i32, i32) {
    %c0_i32 = arith.constant 0 : i32
    %c0_i32_0 = arith.constant 0 : i32
    %c0_i32_1 = arith.constant 0 : i32
    return %c0_i32, %c0_i32_0 : i32, i32
  }
}

</mosaic_0001>

<llo_original>
// kernel: tpu_custom_call.1
$region0: #{tpu_custom_call.1}
  #allocation0 [shape = 'u32[]', space=smem, size = 0x4, offset = 0x4, fixed_abs, tag = 'smem constant byte address 0x4 - core index']
  #allocation1 [shape = 'u32[72,128]{1,0:T(1,128)}', space=vmem, size = 0x9000, scoped, tag = 'internal scratch']
  %s0 = inlined_call_operand.hbm [shape: bf16[16,32], index: 0, kind: input, shape index: {}]
  %s1 = inlined_call_operand.hbm [shape: bf16[32,128], index: 1, kind: input, shape index: {}]
  %s2 = inlined_call_operand.hbm [shape: f32[1,128], index: 2, kind: output, shape index: {0}]
  %s3 = inlined_call_operand.hbm [shape: f32[1,128], index: 3, kind: output, shape index: {1}]
  %4 = xla_tuple %s2, %s3
  %s5 = sld [smem:[#allocation0]]
  $region38: #{tpu_custom_call.1} parent=0
    _
  %s7 = ssub.s32 1, %s5
  %s8 = scalar_select 0, %s7, %s5
  $region1: #{tpu_custom_call.1} parent=0
    #allocation2 [shape = 'u8[4096]{0}', space=vmem, size = 0x1000, scoped, tag = 'input window, operand 0, single buffered']
    #allocation3 [shape = 's32[1]{0}', space=sflag, size = 0x4, scoped, tag = 'scoped memory for tpu_custom_call.1']
    #allocation4 [shape = 's32[1]{0}', space=sflag, size = 0x4, scoped, tag = 'scoped memory for tpu_custom_call.1']
    #allocation5 [shape = 'u8[8192]{0}', space=vmem, size = 0x2000, scoped, tag = 'input window, operand 1, single buffered']
    #allocation6 [shape = 's32[1]{0}', space=sflag, size = 0x4, scoped, tag = 'scoped memory for tpu_custom_call.1']
    #allocation7 [shape = 'u8[512]{0}', space=vmem, size = 0x400, scoped, tag = 'output window, operand 0, single buffered']
    #allocation8 [shape = 'u8[512]{0}', space=vmem, size = 0x400, scoped, tag = 'output window, operand 1, single buffered']
    #allocation9 [shape = 's32[1]{0}', space=sflag, size = 0x4, scoped, tag = 'scoped memory for tpu_custom_call.1']
    %9 = vsyncpa [#allocation3], 0
    %10 = vsyncpa [#allocation6], 0
    %11 = vsyncpa [#allocation4], 0
    %12 = vsyncpa [#allocation9], 0
    // Predicated region
    $region2: #{tpu_custom_call.1} parent=1 // pred_check
      _
    $region3: #{tpu_custom_call.1} parent=1 // pred_check_branch
      %14 = sbr.rel (0) target = $region5
    $region4: #{tpu_custom_call.1} parent=1 // pred_region
      %16 = vsyncadd [#allocation3], 0
      %s17 = sshll.u32 %s0, 4
      %s18 = int_to_ptr.hbm [resolvable:$true] %s17
      %s19 = sshll.u32 [#allocation2], 4
      %s20 = int_to_ptr.vmem [resolvable:$true] %s19
      %25 = dma.hbm_to_vmem [thread:$0]  %s18, 128, %s20, [#allocation3], 64, 64, 4
    $region5: #{tpu_custom_call.1} parent=1 // pred_fallthru
      _
    // Predicated region
    $region6: #{tpu_custom_call.1} parent=1 // pred_check
      _
    $region7: #{tpu_custom_call.1} parent=1 // pred_check_branch
      %27 = sbr.rel (0) target = $region9
    $region8: #{tpu_custom_call.1} parent=1 // pred_region
      %29 = vsyncadd [#allocation6], 0
      %s30 = sshll.u32 %s1, 4
      %s31 = int_to_ptr.hbm [resolvable:$true] %s30
      %s32 = sshll.u32 [#allocation5], 4
      %s33 = int_to_ptr.vmem [resolvable:$true] %s32
      %38 = dma.hbm_to_vmem [thread:$0]  %s31, 256, %s33, [#allocation6], 64, 64, 4
    $region9: #{tpu_custom_call.1} parent=1 // pred_fallthru
      _
    // Predicated region
    $region10: #{tpu_custom_call.1} parent=1 // pred_check
      _
    $region11: #{tpu_custom_call.1} parent=1 // pred_check_branch
      %40 = sbr.rel (0) target = $region13
    $region12: #{tpu_custom_call.1} parent=1 // pred_region
      %42 = dma.done [#allocation3], 128
    $region13: #{tpu_custom_call.1} parent=1 // pred_fallthru
      _
    // Predicated region
    $region14: #{tpu_custom_call.1} parent=1 // pred_check
      _
    $region15: #{tpu_custom_call.1} parent=1 // pred_check_branch
      %44 = sbr.rel (0) target = $region17
    $region16: #{tpu_custom_call.1} parent=1 // pred_region
      %46 = dma.done [#allocation6], 256
    $region17: #{tpu_custom_call.1} parent=1 // pred_fallthru
      _
    %p48 = scmp.eq.s32.totalorder 0, 0
    // Predicated region
    $region18: #{tpu_custom_call.1} parent=1 // pred_check
      %p49 = pneg %p48
    $region19: #{tpu_custom_call.1} parent=1 // pred_check_branch
      %51 = sbr.rel (%p49) target = $region21
    $region20: #{tpu_custom_call.1} parent=1 // pred_region
      %52 = vst [vmem:[#allocation7] sm:$0x1] 0.0
      %53 = vst [vmem:[#allocation8] sm:$0x1] 0.0
    $region21: #{tpu_custom_call.1} parent=1 // pred_fallthru
      _
    %v54 = vld [vmem:[#allocation2] sm:$0xf]
    %v55 = vld [vmem:[#allocation2 + $0x4] sm:$0xf]
    %v56 = vld [vmem:[#allocation5] sm:$0xf]
    %v57 = vld [vmem:[#allocation5 + $0x4] sm:$0xf]
    %v58 = vld [vmem:[#allocation5 + $0x8] sm:$0xf]
    %v59 = vld [vmem:[#allocation5 + $0xc] sm:$0xf]
    %v62 = vunpack.c.l.b16 %v54
    %v63 = vunpack.c.l.b16 %v55
    %v64 = vpack.c.b16 %v63, %v62
    %v69 = vunpack.c.l.b16 %v56
    %v70 = vunpack.c.l.b16 %v57
    %v71 = vunpack.c.l.b16 %v58
    %v72 = vunpack.c.l.b16 %v59
    %v73 = vpack.c.b16 %v70, %v69
    %v74 = vpack.c.b16 %v72, %v71
    %vm77 = vcmask 261120
    %v79 = vsel %vm77, %v64, 0
    %81 = vmatpush.bf16.msra.mxu0 0
    %82 = vmatpush.bf16.msra.mxu0 0
    %83 = vmatpush.bf16.msra.mxu0 0
    %84 = vmatpush.bf16.msra.mxu0 0
    %85 = vmatpush.bf16.msra.mxu0 0
    %86 = vmatpush.bf16.msra.mxu0 0
    %87 = vmatpush.bf16.msra.mxu0 %v74
    %88 = vmatpush.bf16.msra.mxu0 %v73
    %89 = vmatmul.bf16.gmra.mxu0 %v79
    %v90 = vpop.f32.mrf.mxu0
    %v91 = vadd.f32 0.0, %v90
    %v92 = vpop.f32.mrf.mxu0
    %v93 = vadd.f32 0.0, %v92
    %94 = vdwg.mxu0
    %v95 = vld [vmem:[#allocation7] sm:$0x1]
    %v96 = vadd.f32 %v91, %v93
    %v97 = vrot.slane %v96, 4
    %v98 = vadd.f32 %v96, %v97
    %v99 = vrot.slane %v98, 2
    %v100 = vadd.f32 %v98, %v99
    %v101 = vrot.slane %v100, 1
    %v102 = vadd.f32 %v100, %v101
    %v103 = vadd.f32 %v95, %v102
    %104 = vst [vmem:[#allocation7] sm:$0x1] %v103
    %v105 = vld [vmem:[#allocation8] sm:$0x1]
    %v106 = vmul.f32 %v91, %v91
    %v107 = vmul.f32 %v93, %v93
    %v108 = vadd.f32 %v106, %v107
    %v109 = vrot.slane %v108, 4
    %v110 = vadd.f32 %v108, %v109
    %v111 = vrot.slane %v110, 2
    %v112 = vadd.f32 %v110, %v111
    %v113 = vrot.slane %v112, 1
    %v114 = vadd.f32 %v112, %v113
    %v115 = vadd.f32 %v105, %v114
    %116 = vst [vmem:[#allocation8] sm:$0x1] %v115
    // Predicated region
    $region22: #{tpu_custom_call.1} parent=1 // pred_check
      _
    $region23: #{tpu_custom_call.1} parent=1 // pred_check_branch
      %118 = sbr.rel (0) target = $region25
    $region24: #{tpu_custom_call.1} parent=1 // pred_region
      %120 = vsyncadd [#allocation4], 0
      %s122 = sshll.u32 [#allocation7], 4
      %s123 = int_to_ptr.vmem [resolvable:$true] %s122
      %s124 = sshll.u32 %s2, 4
      %s125 = int_to_ptr.hbm [resolvable:$true] %s124
      %127 = dma.vmem_to_hbm [thread:$0]  %s123, 16, %s125, [#allocation4]
    $region25: #{tpu_custom_call.1} parent=1 // pred_fallthru
      _
    // Predicated region
    $region26: #{tpu_custom_call.1} parent=1 // pred_check
      _
    $region27: #{tpu_custom_call.1} parent=1 // pred_check_branch
      %129 = sbr.rel (0) target = $region29
    $region28: #{tpu_custom_call.1} parent=1 // pred_region
      %131 = vsyncadd [#allocation9], 0
      %s133 = sshll.u32 [#allocation8], 4
      %s134 = int_to_ptr.vmem [resolvable:$true] %s133
      %s135 = sshll.u32 %s3, 4
      %s136 = int_to_ptr.hbm [resolvable:$true] %s135
      %138 = dma.vmem_to_hbm [thread:$0]  %s134, 16, %s136, [#allocation9]
    $region29: #{tpu_custom_call.1} parent=1 // pred_fallthru
      _
    // Predicated region
    $region30: #{tpu_custom_call.1} parent=1 // pred_check
      _
    $region31: #{tpu_custom_call.1} parent=1 // pred_check_branch
      %140 = sbr.rel (0) target = $region33
    $region32: #{tpu_custom_call.1} parent=1 // pred_region
      %142 = dma.done [#allocation4], 16
    $region33: #{tpu_custom_call.1} parent=1 // pred_fallthru
      _
    // Predicated region
    $region34: #{tpu_custom_call.1} parent=1 // pred_check
      _
    $region35: #{tpu_custom_call.1} parent=1 // pred_check_branch
      %144 = sbr.rel (0) target = $region37
    $region36: #{tpu_custom_call.1} parent=1 // pred_region
      %146 = dma.done [#allocation9], 16
    $region37: #{tpu_custom_call.1} parent=1 // pred_fallthru
      _
    %147 = vsyncpa [#allocation3], 1
    %148 = vsyncpa [#allocation6], 1
    %149 = vsyncpa [#allocation4], 1
    %150 = vsyncpa [#allocation9], 1

</llo_original>
